<compile_context>
chip_gen: v5e
topology: v5e:2x2
jax: 0.10.0
libtpu: 0.0.40
codegen_flags: <defaults>
</compile_context>

<pallas_src>
import functools

import jax
import jax.numpy as jnp
from jax.experimental import pallas as pl
from jax.experimental.pallas import tpu as pltpu

_LANE = 128
_SUBLANE = 8


# -----------------------------------------------------------------------------
# Kernels
# -----------------------------------------------------------------------------
def _dispreg_kernel(x_ref, o_ref):
    """x_ref: (D, tH, tW) VMEM tile, o_ref: (tH, tW).

    Weighted reduction over the disparity axis, accumulated in f32.  The
    disparity ramp is never materialized as a (D, tH, tW) tensor; each
    disparity slice is multiplied by its scalar index and accumulated.
    The kernel is HBM-bound, so the D VPU mul-adds hide under the input DMA;
    no MXU reformulation is warranted (M=1 matmul would waste the array and
    need an XLU shuffle).
    """
    D = x_ref.shape[0]
    acc0 = jnp.zeros(o_ref.shape, jnp.float32)

    def body(d, acc):
        return acc + x_ref[d].astype(jnp.float32) * d.astype(jnp.float32)

    # Partial unroll: keeps LLO scheduling visibility without bloating the
    # bundle stream / vreg live ranges for large disparity counts (D ~ 48-192).
    acc = jax.lax.fori_loop(0, D, body, acc0, unroll=min(D, 8))
    o_ref[...] = acc.astype(o_ref.dtype)


def _softmax_dispreg_kernel(x_ref, o_ref):
    """Fused softmax(logits, axis=D) + disparity regression in one HBM pass.

    The pipeline is HBM-bound; fusing avoids writing and re-reading the full
    [B, D, H, W] softmax output (~3x less HBM traffic).  The unfused
    `disparity_regression` below keeps the exact module semantics.
    """
    D = x_ref.shape[0]

    def max_body(d, m):
        return jnp.maximum(m, x_ref[d].astype(jnp.float32))

    m = jax.lax.fori_loop(1, D, max_body, x_ref[0].astype(jnp.float32),
                          unroll=min(max(D - 1, 1), 8))

    zeros = jnp.zeros(o_ref.shape, jnp.float32)

    def body(d, carry):
        num, den = carry
        p = jnp.exp(x_ref[d].astype(jnp.float32) - m)  # EUP slot, ~free here
        return num + p * d.astype(jnp.float32), den + p

    num, den = jax.lax.fori_loop(0, D, body, (zeros, zeros), unroll=min(D, 8))
    o_ref[...] = (num / den).astype(o_ref.dtype)


# -----------------------------------------------------------------------------
# Tiling heuristics (generation- and padding-aware)
# -----------------------------------------------------------------------------
def _round_up(x, m):
    return ((x + m - 1) // m) * m


@functools.lru_cache(maxsize=None)
def _hw_budgets():
    """(per-input-block VMEM budget, vmem_limit_bytes), generation aware.

    v5e/v6e have 128 MiB physical VMEM -> bigger streaming tiles amortize the
    ~0.35us/grid-step overhead; v7x only has 64 MiB -> stay conservative so
    the double-buffered input blocks never overshoot.
    """
    vmem_cap = 64 * 1024 * 1024  # conservative default (v7x-sized)
    try:
        info = pltpu.get_tpu_info()
        for attr in ("vmem_capacity_bytes", "vmem_size_bytes", "vmem_bytes"):
            cap = getattr(info, attr, None)
            if cap:
                vmem_cap = int(cap)
                break
    except Exception:
        pass
    if vmem_cap >= 96 * 1024 * 1024:               # v5e / v6e (128 MiB VMEM)
        return 20 * 1024 * 1024, 80 * 1024 * 1024
    return 10 * 1024 * 1024, 44 * 1024 * 1024      # v7x (64 MiB VMEM)


def _choose_tiles(B, D, H, W, itemsize, block_budget):
    """Pick (tH, tW) so the *padded* (D, tH, tW) input block fits the budget,
    the output block stays as lane-dense as the problem allows, and the grid
    has enough steps for double-buffering + megacore sharding.

    Tiles use cdiv semantics, so tH/tW need not divide H/W: the edge blocks
    are partial (padded reads, masked writes).  That is safe here because the
    reduction is purely elementwise per (h, w) position.
    """
    sub = _SUBLANE * max(1, 4 // itemsize)   # f32: 8, bf16: 16 (packed sublanes)
    Wp = _round_up(W, _LANE)                 # real VMEM footprint pads W to 128

    # Preferred: keep full W (lane-dense output stores, large contiguous DMAs).
    slab = D * sub * Wp * itemsize           # bytes of one sublane-unit, full-W slab
    if slab <= block_budget:
        tW = W
        tH = (block_budget // slab) * sub
        if tH >= H:
            tH = H                            # full H: always a legal block
    else:
        # Even a (D, sub, W) slab overshoots -> also tile W in lane multiples.
        tH = H if H <= sub else sub
        col = D * _round_up(tH, sub) * _LANE * itemsize
        tW = max(1, block_budget // col) * _LANE
        if tW >= W:
            tW = W

    # Guarantee enough grid steps so both v7x TensorCores get work and the
    # double-buffer pipeline actually overlaps DMA with compute.
    min_steps = 4

    def n_steps(th, tw):
        return B * (-(-H // th)) * (-(-W // tw))

    while n_steps(tH, tW) < min_steps and tH > sub:
        tH = max(sub, _round_up(tH // 2, sub))
    while n_steps(tH, tW) < min_steps and tW > _LANE:
        tW = max(_LANE, _round_up(tW // 2, _LANE))
    return tH, tW


# -----------------------------------------------------------------------------
# Wrapper
# -----------------------------------------------------------------------------
def _dispreg_call(kernel, x, out_dtype):
    B, D, H, W = x.shape
    block_budget, vmem_limit = _hw_budgets()
    tH, tW = _choose_tiles(B, D, H, W, x.dtype.itemsize, block_budget)
    grid = (B, pl.cdiv(H, tH), pl.cdiv(W, tW))
    return pl.pallas_call(
        kernel,
        out_shape=jax.ShapeDtypeStruct((B, H, W), out_dtype),
        grid=grid,
        in_specs=[
            # Batch squeezed out of the kernel view; full D (the reduction is
            # done in-register); H and W tiled (cdiv) for auto-pipelining.
            pl.BlockSpec((None, D, tH, tW), lambda b, h, w: (b, 0, h, w)),
        ],
        out_specs=pl.BlockSpec((None, tH, tW), lambda b, h, w: (b, h, w)),
        compiler_params=pltpu.CompilerParams(
            # All grid axes are independent -> shard across v7x's 2 TensorCores.
            dimension_semantics=("parallel", "parallel", "parallel"),
            vmem_limit_bytes=vmem_limit,
        ),
    )(x)


def disparity_regression(x, out_dtype=None):
    """Pallas equivalent of disparityregression.forward.

    x: [B, D, H, W] (typically softmax probabilities over disparity; f32 or
       bf16 — the kernel always accumulates in f32)
    returns: [B, H, W] = sum_d x[:, d] * d   (dtype = x.dtype unless overridden)
    """
    return _dispreg_call(_dispreg_kernel, x, out_dtype or x.dtype)


def softmax_disparity_regression(logits, out_dtype=None):
    """Optional fused path, equivalent to
    disparity_regression(jax.nn.softmax(logits, axis=1))."""
    return _dispreg_call(_softmax_dispreg_kernel, logits, out_dtype or logits.dtype)


# -----------------------------------------------------------------------------
# Reference & test
# -----------------------------------------------------------------------------
def disparity_regression_ref(x):
    B, D, H, W = x.shape
    disp = jnp.arange(D, dtype=jnp.float32).reshape(1, D, 1, 1)
    return jnp.sum(x.astype(jnp.float32) * disp, axis=1).astype(x.dtype)


if __name__ == "__main__":
    key = jax.random.PRNGKey(0)

    # Case 1: f32, shapes matching the module's typical (small) use.
    B, D, H, W = 2, 4, 16, 16  # D = maxdisp
    logits = jax.random.normal(key, (B, D, H, W), dtype=jnp.float32)
    x = jax.nn.softmax(logits, axis=1)  # typical input: prob over disparities

    out = jax.block_until_ready(disparity_regression(x))
    ref = disparity_regression_ref(x)
    assert out.shape == (B, H, W), out.shape
    assert jnp.allclose(out, ref, atol=1e-5, rtol=1e-5), "mismatch vs reference"

    fused = jax.block_until_ready(softmax_disparity_regression(logits))
    assert jnp.allclose(fused, ref, atol=1e-5, rtol=1e-5), "fused mismatch"

    # Case 2: bf16 input, B=1 with H not a multiple of the tile -> exercises
    # the cdiv / partial-edge-tile path and the >=2-grid-steps splitting.
    B2, D2, H2, W2 = 1, 4, 20, 16
    logits2 = jax.random.normal(jax.random.PRNGKey(1), (B2, D2, H2, W2),
                                dtype=jnp.float32)
    x2 = jax.nn.softmax(logits2, axis=1).astype(jnp.bfloat16)
    out2 = jax.block_until_ready(disparity_regression(x2))
    ref2 = disparity_regression_ref(x2)
    assert out2.shape == (B2, H2, W2), out2.shape
    assert jnp.allclose(out2.astype(jnp.float32), ref2.astype(jnp.float32),
                        atol=2e-2, rtol=2e-2), "bf16 mismatch vs reference"

    print("KERNEL_OK")
</pallas_src>

<mosaic_0001>
module attributes {stable_mosaic.version = 11 : i64} {
  func.func @_dispreg_kernel(%arg0: i32, %arg1: i32, %arg2: i32, %arg3: memref<1x4x8x16xf32, #tpu.memory_space<vmem>>, %arg4: memref<1x8x16xf32, #tpu.memory_space<vmem>>) attributes {dimension_semantics = [#tpu.dimension_semantics<parallel>, #tpu.dimension_semantics<parallel>, #tpu.dimension_semantics<parallel>], iteration_bounds = array<i64: 2, 2, 1>, scalar_prefetch = 0 : i64, scratch_operands = 0 : i64, tpu.core_type = #tpu.core_type<tc>, window_params = [{transform_indices = @transform_0, window_bounds = array<i64: 1, 4, 8, 16>}, {transform_indices = @transform_1, window_bounds = array<i64: 1, 8, 16>}]} {
    %cst = arith.constant 0.000000e+00 : f32
    %0 = vector.broadcast %cst : f32 to vector<8x16xf32>
    %c0_i32 = arith.constant 0 : i32
    %c0 = arith.constant 0 : index
    %1 = arith.index_cast %c0_i32 : i32 to index
    %c0_0 = arith.constant 0 : index
    %c0_1 = arith.constant 0 : index
    %2 = vector.load %arg3[%c0, %1, %c0_0, %c0_1] : memref<1x4x8x16xf32, #tpu.memory_space<vmem>>, vector<1x1x8x16xf32>
    %3 = vector.shape_cast %2 : vector<1x1x8x16xf32> to vector<8x16xf32>
    %4 = arith.sitofp %c0_i32 : i32 to f32
    %5 = vector.broadcast %4 : f32 to vector<8x16xf32>
    %6 = arith.mulf %3, %5 : vector<8x16xf32>
    %7 = arith.addf %0, %6 : vector<8x16xf32>
    %c1_i32 = arith.constant 1 : i32
    %c0_2 = arith.constant 0 : index
    %8 = arith.index_cast %c1_i32 : i32 to index
    %c0_3 = arith.constant 0 : index
    %c0_4 = arith.constant 0 : index
    %9 = vector.load %arg3[%c0_2, %8, %c0_3, %c0_4] : memref<1x4x8x16xf32, #tpu.memory_space<vmem>>, vector<1x1x8x16xf32>
    %10 = vector.shape_cast %9 : vector<1x1x8x16xf32> to vector<8x16xf32>
    %11 = arith.sitofp %c1_i32 : i32 to f32
    %12 = vector.broadcast %11 : f32 to vector<8x16xf32>
    %13 = arith.mulf %10, %12 : vector<8x16xf32>
    %14 = arith.addf %7, %13 : vector<8x16xf32>
    %c2_i32 = arith.constant 2 : i32
    %c0_5 = arith.constant 0 : index
    %15 = arith.index_cast %c2_i32 : i32 to index
    %c0_6 = arith.constant 0 : index
    %c0_7 = arith.constant 0 : index
    %16 = vector.load %arg3[%c0_5, %15, %c0_6, %c0_7] : memref<1x4x8x16xf32, #tpu.memory_space<vmem>>, vector<1x1x8x16xf32>
    %17 = vector.shape_cast %16 : vector<1x1x8x16xf32> to vector<8x16xf32>
    %18 = arith.sitofp %c2_i32 : i32 to f32
    %19 = vector.broadcast %18 : f32 to vector<8x16xf32>
    %20 = arith.mulf %17, %19 : vector<8x16xf32>
    %21 = arith.addf %14, %20 : vector<8x16xf32>
    %c3_i32 = arith.constant 3 : i32
    %c0_8 = arith.constant 0 : index
    %22 = arith.index_cast %c3_i32 : i32 to index
    %c0_9 = arith.constant 0 : index
    %c0_10 = arith.constant 0 : index
    %23 = vector.load %arg3[%c0_8, %22, %c0_9, %c0_10] : memref<1x4x8x16xf32, #tpu.memory_space<vmem>>, vector<1x1x8x16xf32>
    %24 = vector.shape_cast %23 : vector<1x1x8x16xf32> to vector<8x16xf32>
    %25 = arith.sitofp %c3_i32 : i32 to f32
    %26 = vector.broadcast %25 : f32 to vector<8x16xf32>
    %27 = arith.mulf %24, %26 : vector<8x16xf32>
    %28 = arith.addf %21, %27 : vector<8x16xf32>
    %c4_i32 = arith.constant 4 : i32
    %c0_11 = arith.constant 0 : index
    %c0_12 = arith.constant 0 : index
    %c0_13 = arith.constant 0 : index
    %29 = vector.load %arg4[%c0_11, %c0_12, %c0_13] : memref<1x8x16xf32, #tpu.memory_space<vmem>>, vector<1x8x16xf32>
    %30 = vector.shape_cast %29 : vector<1x8x16xf32> to vector<8x16xf32>
    %31 = vector.shape_cast %28 : vector<8x16xf32> to vector<1x8x16xf32>
    tpu.vector_store %arg4[%c0_11, %c0_12, %c0_13], %31 {strides = array<i32>} : memref<1x8x16xf32, #tpu.memory_space<vmem>>, vector<1x8x16xf32>,
    return
  }
  func.func @transform_0(%arg0: i32, %arg1: i32, %arg2: i32) -> (i32, i32, i32, i32) {
    %c0_i32 = arith.constant 0 : i32
    %c0_i32_0 = arith.constant 0 : i32
    return %arg0, %c0_i32, %arg1, %arg2 : i32, i32, i32, i32
  }
  func.func @transform_1(%arg0: i32, %arg1: i32, %arg2: i32) -> (i32, i32, i32) {
    %c0_i32 = arith.constant 0 : i32
    return %arg0, %arg1, %arg2 : i32, i32, i32
  }
}

</mosaic_0001>

<llo_original>
// kernel: tpu_custom_call.1
$region0: #{tpu_custom_call.1}
  #allocation0 [shape = 'u32[]', space=smem, size = 0x4, offset = 0x4, fixed_abs, tag = 'smem constant byte address 0x4 - core index']
  #allocation1 [shape = 'u32[72,128]{1,0:T(1,128)}', space=vmem, size = 0x9000, scoped, tag = 'internal scratch']
  %s0 = inlined_call_operand.hbm [shape: f32[2,4,16,16], index: 0, kind: input, shape index: {}]
  %s1 = inlined_call_operand.hbm [shape: f32[2,16,16], index: 1, kind: output, shape index: {}]
  %s2 = sld [smem:[#allocation0]]
  $region41: #{tpu_custom_call.1} parent=0
    _
  %s4 = ssub.s32 1, %s2
  %s5 = scalar_select 0, %s4, %s2
  $region1: #{tpu_custom_call.1} parent=0
    #allocation2 [shape = 'u8[32768]{0}', space=vmem, size = 0x8000, scoped, tag = 'input window, operand 0']
    #allocation3 [shape = 's32[2]{0}', space=sflag, size = 0x8, scoped, tag = 'scoped memory for tpu_custom_call.1']
    #allocation4 [shape = 's32[2]{0}', space=sflag, size = 0x8, scoped, tag = 'scoped memory for tpu_custom_call.1']
    #allocation5 [shape = 'u8[8192]{0}', space=vmem, size = 0x2000, scoped, tag = 'output window, operand 0']
    %6 = vsyncpa [#allocation3], 0
    %s7 = scalar_lea.sflag [#allocation3], 1
    %8 = vsyncpa %s7, 0
    %9 = vsyncpa [#allocation4], 0
    %s10 = scalar_lea.sflag [#allocation4], 1
    %11 = vsyncpa %s10, 0
    loop: start=0, step=1, limit=6
    $region2: #{tpu_custom_call.1} parent=1 // loop_pre_header
      _
    $region3: #{tpu_custom_call.1} parent=1 // loop_header
      %s13 = sphi 0, %s17
      %p14 = scmp.ge.s32.totalorder %s13, 6
      %s20 = sphi 0, %s39
      %s21 = sphi 0, %s35
      %s22 = sphi 0, %s31
      %s23 = sphi 0, %s20
      %s24 = sphi 0, %s21
      %s25 = sphi 0, %s22
      %s26 = sphi 0, %s23
      %s27 = sphi 0, %s24
      %s28 = sphi 0, %s25
      %s46 = sphi 0, %s48
      %s49 = sphi 0, %s46
      %s50 = sphi 0, %s49
      %s66 = sphi 0, %s50
      %s76 = sphi 0, %s78
      %s79 = sphi 0, %s76
      %s80 = sphi 0, %s79
      %s96 = sphi 0, %s80
    $region4: #{tpu_custom_call.1} parent=1 // loop_header_branch
      %16 = sbr.rel (%p14) target = $region8
    $region5: #{tpu_custom_call.1} parent=1 // loop_body
      %s18 = ssub.s32 %s13, 1
      %s19 = ssub.s32 %s13, 2
      %s29 = sadd.s32 1, %s22
      %p30 = scmp.ge.s32.totalorder %s29, 1
      %s31 = scalar_select %p30, 0, %s29
      %s32 = sadd.s32 1, %s21
      %s33 = scalar_select %p30, %s32, %s21
      %p34 = scmp.ge.s32.totalorder %s33, 2
      %s35 = scalar_select %p34, 0, %s33
      %s36 = sadd.s32 1, %s20
      %s37 = scalar_select %p34, %s36, %s20
      %p38 = scmp.ge.s32.totalorder %s37, 2
      %s39 = scalar_select %p38, 0, %s37
      %s40 = ssub.s32 %s20, %s39
      %s41 = ssub.s32 %s21, %s35
      %s42 = sor.u32 %s40, %s41
      %s43 = ssub.s32 %s22, %s31
      %s44 = sor.u32 %s42, %s43
      %p45 = scmp.eq.s32.totalorder %s44, 0
      %s47 = sadd.s32 %s46, 1
      %s48 = scalar_select %p45, %s46, %s47
      %p51 = pneg %p45
      %p52 = scmp.eq.s32.totalorder %s13, 3
      %p53 = por %p51, %p52
      %p54 = scmp.ne.s32.totalorder %s46, %s49
      %p55 = scmp.eq.s32.totalorder %s13, 0
      %p56 = por %p54, %p55
      %p57 = scmp.ne.s32.totalorder %s46, %s49
      %p58 = scmp.eq.s32.totalorder %s18, 3
      %p59 = por %p57, %p58
      %p60 = scmp.ne.s32.totalorder %s49, %s50
      %p61 = scmp.eq.s32.totalorder %s18, 0
      %p62 = por %p60, %p61
      %p63 = scmp.ne.s32.totalorder %s49, %s50
      %p64 = scmp.eq.s32.totalorder %s19, 3
      %p65 = por %p63, %p64
      %p67 = scmp.ne.s32.totalorder %s50, %s66
      %p68 = scmp.eq.s32.totalorder %s19, 0
      %p69 = por %p67, %p68
      %s70 = ssub.s32 %s20, %s39
      %s71 = ssub.s32 %s21, %s35
      %s72 = sor.u32 %s70, %s71
      %s73 = ssub.s32 %s22, %s31
      %s74 = sor.u32 %s72, %s73
      %p75 = scmp.eq.s32.totalorder %s74, 0
      %s77 = sadd.s32 %s76, 1
      %s78 = scalar_select %p75, %s76, %s77
      %p81 = pneg %p75
      %p82 = scmp.eq.s32.totalorder %s13, 3
      %p83 = por %p81, %p82
      %p84 = scmp.ne.s32.totalorder %s76, %s79
      %p85 = scmp.eq.s32.totalorder %s13, 0
      %p86 = por %p84, %p85
      %p87 = scmp.ne.s32.totalorder %s76, %s79
      %p88 = scmp.eq.s32.totalorder %s18, 3
      %p89 = por %p87, %p88
      %p90 = scmp.ne.s32.totalorder %s79, %s80
      %p91 = scmp.eq.s32.totalorder %s18, 0
      %p92 = por %p90, %p91
      %p93 = scmp.ne.s32.totalorder %s79, %s80
      %p94 = scmp.eq.s32.totalorder %s19, 3
      %p95 = por %p93, %p94
      %p97 = scmp.ne.s32.totalorder %s80, %s96
      %p98 = scmp.eq.s32.totalorder %s19, 0
      %p99 = por %p97, %p98
      %p100 = scmp.le.s32.totalorder 1, %s13
      %p101 = scmp.lt.s32.totalorder %s13, 5
      %p102 = pnand %p100, %p101
      %p103 = pneg %p102
      // Predicated region
      $region9: #{tpu_custom_call.1} parent=5 // pred_check
        _
      $region10: #{tpu_custom_call.1} parent=5 // pred_check_branch
        %105 = sbr.rel (%p102) target = $region12
      $region11: #{tpu_custom_call.1} parent=5 // pred_region
        %s106 = ssub.s32 %s13, 1
      $region12: #{tpu_custom_call.1} parent=5 // pred_fallthru
        _
      %p107 = scmp.lt.s32.totalorder %s13, 4
      // Predicated region
      $region13: #{tpu_custom_call.1} parent=5 // pred_check
        %p108 = pneg %p107
      $region14: #{tpu_custom_call.1} parent=5 // pred_check_branch
        %110 = sbr.rel (%p108) target = $region16
      $region15: #{tpu_custom_call.1} parent=5 // pred_region
        // Predicated region
        $region17: #{tpu_custom_call.1} parent=15 // pred_check
          %p111 = pneg %p56
        $region18: #{tpu_custom_call.1} parent=15 // pred_check_branch
          %113 = sbr.rel (%p111) target = $region20
        $region19: #{tpu_custom_call.1} parent=15 // pred_region
          %s114 = sand.u32 %s46, 1
          %s115 = scalar_lea.sflag [#allocation3], %s114
          %s116 = sand.u32 %s46, 1
          %s117 = smul.addr %s116, 32
          %s118 = scalar_lea.vmem [#allocation2], %s117
          %120 = vsyncadd %s115, 0
          %s121 = sadd.s32 %s22, %s21
          %s122 = smul.addr %s20, 8
          %s123 = sadd.s32 %s121, %s122
          %s124 = smul.addr %s123, 8
          %s125 = scalar_lea.hbm %s0, %s124
          %s126 = sshll.u32 %s125, 4
          %s127 = int_to_ptr.hbm [resolvable:$true] %s126
          %s128 = sshll.u32 %s118, 4
          %s129 = int_to_ptr.vmem [resolvable:$true] %s128
          %134 = dma.hbm_to_vmem [thread:$0]  %s127, 512, %s129, %s115, 256, 128, 8
        $region20: #{tpu_custom_call.1} parent=15 // pred_fallthru
          _
      $region16: #{tpu_custom_call.1} parent=5 // pred_fallthru
        _
      %p135 = scmp.le.s32.totalorder 1, %s13
      %p136 = scmp.lt.s32.totalorder %s13, 5
      %p137 = pnand %p135, %p136
      %p138 = pneg %p137
      // Predicated region
      $region21: #{tpu_custom_call.1} parent=5 // pred_check
        _
      $region22: #{tpu_custom_call.1} parent=5 // pred_check_branch
        %140 = sbr.rel (%p137) target = $region24
      $region23: #{tpu_custom_call.1} parent=5 // pred_region
        %s141 = ssub.s32 %s13, 1
        %s142 = sand.u32 %s49, 1
        %s143 = scalar_lea.sflag [#allocation3], %s142
        %s144 = sand.u32 %s49, 1
        %s145 = smul.addr %s144, 32
        %s146 = scalar_lea.vmem [#allocation2], %s145
        // Predicated region
        $region25: #{tpu_custom_call.1} parent=23 // pred_check
          %p147 = pneg %p62
        $region26: #{tpu_custom_call.1} parent=23 // pred_check_branch
          %149 = sbr.rel (%p147) target = $region28
        $region27: #{tpu_custom_call.1} parent=23 // pred_region
          %151 = dma.done %s143, 512
        $region28: #{tpu_custom_call.1} parent=23 // pred_fallthru
          _
        %s152 = sand.u32 %s49, 1
        %s153 = scalar_lea.sflag [#allocation3], %s152
        %s154 = sand.u32 %s49, 1
        %s155 = smul.addr %s154, 32
        %s156 = scalar_lea.vmem [#allocation2], %s155
        %p157 = pneg %p62
        %p158 = pneg %p59
        %p159 = pneg %p92
        %p160 = pneg %p89
        %s161 = sand.u32 %s79, 1
        %s162 = scalar_lea.sflag [#allocation4], %s161
        %s163 = sand.u32 %s79, 1
        %s164 = smul.addr %s163, 8
        %s165 = scalar_lea.vmem [#allocation5], %s164
        %v166 = vld [vmem:[%s146] sm:$0xff]
        %v167 = vmul.f32 %v166, 0.0
        %v168 = vadd.f32 %v167, 0.0
        %s169 = scalar_lea.vmem %s146, 8 [#allocation2]
        %v170 = vld [vmem:[%s169] sm:$0xff]
        %v171 = vadd.f32 %v168, %v170
        %s172 = scalar_lea.vmem %s146, 16 [#allocation2]
        %v173 = vld [vmem:[%s172] sm:$0xff]
        %v174 = vmul.f32 %v173, 2.0
        %v175 = vadd.f32 %v171, %v174
        %s176 = scalar_lea.vmem %s146, 24 [#allocation2]
        %v177 = vld [vmem:[%s176] sm:$0xff]
        %v178 = vmul.f32 %v177, 3.0
        %v179 = vadd.f32 %v175, %v178
        %vm180 = vcmask 130048
        %181 = vst.msk [vmem:[%s165] sm:$0xff] %vm180, %v179
        %s182 = sand.u32 %s79, 1
        %s183 = scalar_lea.sflag [#allocation4], %s182
        %s184 = sand.u32 %s79, 1
        %s185 = smul.addr %s184, 8
        %s186 = scalar_lea.vmem [#allocation5], %s185
        // Predicated region
        $region29: #{tpu_custom_call.1} parent=23 // pred_check
          %p187 = pneg %p89
        $region30: #{tpu_custom_call.1} parent=23 // pred_check_branch
          %189 = sbr.rel (%p187) target = $region32
        $region31: #{tpu_custom_call.1} parent=23 // pred_region
          %191 = vsyncadd %s183, 0
          %s192 = sadd.s32 %s25, %s24
          %s193 = smul.addr %s23, 2
          %s194 = sadd.s32 %s192, %s193
          %s195 = smul.addr %s194, 8
          %s196 = scalar_lea.hbm %s1, %s195
          %s198 = sshll.u32 %s186, 4
          %s199 = int_to_ptr.vmem [resolvable:$true] %s198
          %s200 = sshll.u32 %s196, 4
          %s201 = int_to_ptr.hbm [resolvable:$true] %s200
          %203 = dma.vmem_to_hbm [thread:$0]  %s199, 128, %s201, %s183
        $region32: #{tpu_custom_call.1} parent=23 // pred_fallthru
          _
      $region24: #{tpu_custom_call.1} parent=5 // pred_fallthru
        _
      %p204 = scmp.le.s32.totalorder 2, %s13
      // Predicated region
      $region33: #{tpu_custom_call.1} parent=5 // pred_check
        %p205 = pneg %p204
      $region34: #{tpu_custom_call.1} parent=5 // pred_check_branch
        %207 = sbr.rel (%p205) target = $region36
      $region35: #{tpu_custom_call.1} parent=5 // pred_region
        %s208 = ssub.s32 %s13, 2
        // Predicated region
        $region37: #{tpu_custom_call.1} parent=35 // pred_check
          %p209 = pneg %p95
        $region38: #{tpu_custom_call.1} parent=35 // pred_check_branch
          %211 = sbr.rel (%p209) target = $region40
        $region39: #{tpu_custom_call.1} parent=35 // pred_region
          %s212 = sand.u32 %s80, 1
          %s213 = scalar_lea.sflag [#allocation4], %s212
          %s214 = sand.u32 %s80, 1
          %s215 = smul.addr %s214, 8
          %s216 = scalar_lea.vmem [#allocation5], %s215
          %218 = dma.done %s213, 128
        $region40: #{tpu_custom_call.1} parent=35 // pred_fallthru
          _
      $region36: #{tpu_custom_call.1} parent=5 // pred_fallthru
        _
    $region6: #{tpu_custom_call.1} parent=1 // loop_footer
      %s17 = sadd.s32 1, %s13
    $region7: #{tpu_custom_call.1} parent=1 // loop_footer_branch
      %12 = sbr.rel target = $region3
    $region8: #{tpu_custom_call.1} parent=1 // loop_exit
      _
    %219 = vsyncpa [#allocation3], 1
    %s220 = scalar_lea.sflag [#allocation3], 1
    %221 = vsyncpa %s220, 1
    %222 = vsyncpa [#allocation4], 1
    %s223 = scalar_lea.sflag [#allocation4], 1
    %224 = vsyncpa %s223, 1

</llo_original>
